<compile_context>
chip_gen: v7x
topology: tpu7x:2x2x1
jax: 0.10.0
libtpu: 0.0.40
codegen_flags: <defaults>
</compile_context>

<pallas_src>
import functools

import jax
import jax.numpy as jnp
import numpy as np
from jax import lax
from jax.experimental import pallas as pl
from jax.experimental.pallas import tpu as pltpu

ALPHAS = (0.2, 0.5, 1.0, 2.0, 5.0)   # module default: [0.2, 0.5, 1.0, 2.0, 5]
LINEAR_WEIGHT = 1.0

# Row-tile size (bytes, single copy) above which we drop the row tile of Z to a
# single pipeline buffer: its block index is invariant along the inner j axis,
# so the second buffer is nearly pure VMEM waste (one exposed DMA per outer i
# step, amortized over n/tn inner steps).  Matters most on v7x (64 MiB VMEM).
_ROW_SINGLE_BUFFER_BYTES = 4 << 20


def _int_pow(x, k):
    """x**k for a small static positive int k (binary exponentiation, VPU mults)."""
    acc = None
    base = x
    while True:
        if k & 1:
            acc = base if acc is None else acc * base
        k >>= 1
        if not k:
            break
        base = base * base
    return acc


def _rq_term(d2, alpha):
    """(1 + d2/(2*alpha)) ** (-alpha), specialized per (static) alpha."""
    a = float(alpha)
    t = 1.0 + d2 * (1.0 / (2.0 * a))
    if a == 0.5:
        return lax.rsqrt(t)                               # single EUP op
    if a.is_integer() and 1.0 <= a <= 16.0:
        # approx=True: single EUP vrcp push, no Newton refinement; RQ terms
        # tolerate the small relative error (verified vs. reference below).
        return _int_pow(pl.reciprocal(t, approx=True), int(a))
    return jnp.exp((-a) * jnp.log(t))                     # generic path (a = 0.2)


def _mix_rq_linear_kernel(zr_ref, zc_ref, sqr_ref, sqc_ref, out_ref, *,
                          alphas, linear_weight):
    """zr: (tm,F) row tile; zc: (tn,F) col tile; sqr: (tm,1); sqc: (1,tn); out: (tm,tn)."""
    zr = zr_ref[...]
    zc = zc_ref[...]

    # Gram tile on the MXU (contract the feature axis of both operands -> no
    # explicit transpose).  This tile is also exactly the linear-kernel term.
    gram = lax.dot_general(
        zr, zc, (((1,), (1,)), ((), ())), preferred_element_type=jnp.float32
    )  # (tm, tn)

    # Squared pairwise distances from hoisted norms (clamped: the diagonal
    # cancellation can dip slightly negative in f32).
    d2 = jnp.maximum(sqr_ref[...] + sqc_ref[...] - 2.0 * gram, 0.0)

    # Linear-kernel term reuses the Gram tile; then add the RQ mixture.
    acc = gram if linear_weight == 1.0 else linear_weight * gram
    for a in alphas:  # static tuple -> unrolled
        acc = acc + _rq_term(d2, a)

    out_ref[...] = acc
    # TODO(synk): the PyTorch module also stores self.bandwidth =
    # sum(D2) / (n^2 - n) as a module attribute; it does not affect the returned
    # kernel matrix, so it is not computed here.
    # TODO(synk): optional ~2x win: exploit symmetry (compute only i <= j tiles
    # and mirror) — needs a manual transposed-tile writeback, skipped for now.


def _round_up(x, m):
    return ((x + m - 1) // m) * m


def _vmem_bytes(tm, tn, F, row_bufs):
    """Estimated VMEM use: pipelined row/col/norm/out buffers (f32)."""
    row = row_bufs * tm * F * 4
    col = 2 * tn * F * 4
    sq_r = 2 * tm * 128 * 4          # (tm, 1) block, lane-padded to 128
    sq_c = 2 * 8 * tn * 4            # (1, tn) block, sublane-padded to 8
    out = 2 * tm * tn * 4
    return row + col + sq_r + sq_c + out


def _choose_tiles(n_pad, F, budget):
    """Pick (tm, tn, row_bufs): lane-dense tn, VMEM-budgeted tm (shrink tm, never tn)."""
    tn = 128
    for cand in (512, 256, 128):
        if n_pad % cand == 0:
            tn = cand
            break
    tm, row_bufs = 8, 2
    for cand in (512, 256, 128, 64, 32, 16, 8):
        if cand > n_pad or n_pad % cand:
            continue
        bufs = 1 if cand * F * 4 >= _ROW_SINGLE_BUFFER_BYTES else 2
        if _vmem_bytes(cand, tn, F, bufs) <= budget:
            tm, row_bufs = cand, bufs
            break
    # TODO(synk): for F so large that even (8,F)+(tn,F) overflows the budget,
    # add a third (arbitrary) grid axis over the feature dim with a Gram
    # accumulator in VMEM scratch.
    return tm, tn, row_bufs


def mixture_rq_linear(X, Y, alphas=ALPHAS, linear_weight=LINEAR_WEIGHT):
    """Pallas-backed forward of MixtureRQLinear: returns the (2B, 2B) combined kernel."""
    Z = jnp.concatenate([X, Y], axis=0).astype(jnp.float32)  # vstack
    n, F = Z.shape

    # Pad n up to a lane-aligned multiple so every output tile is big and
    # lane-dense (unmasked stores).  Padded rows are zero; they cannot affect
    # the top-left (n, n) block, which is sliced off at the end.
    align = 256 if n >= 1024 else 128
    n_pad = _round_up(max(n, 8), align)
    if n_pad != n:
        Z = jnp.pad(Z, ((0, n_pad - n), (0, 0)))

    # Hoisted squared norms: computed once here, not once per output tile.
    sq = jnp.sum(Z * Z, axis=1)
    sq_r = sq.reshape(n_pad, 1)
    sq_c = sq.reshape(1, n_pad)

    # VMEM-aware tile selection + explicit scoped-VMEM limit.
    try:
        vmem_cap = int(pltpu.get_tpu_info().vmem_capacity_bytes)
    except Exception:
        vmem_cap = 64 << 20           # conservative default (v7x per-core)
    budget = int(vmem_cap * 0.7)      # headroom for compiler-internal scratch
    tm, tn, row_bufs = _choose_tiles(n_pad, F, budget)

    grid = (n_pad // tm, n_pad // tn)

    kernel = functools.partial(
        _mix_rq_linear_kernel,
        alphas=tuple(float(a) for a in alphas),
        linear_weight=float(linear_weight),
    )

    row_spec_kwargs = {}
    if row_bufs == 1:
        row_spec_kwargs["pipeline_mode"] = pl.Buffered(1)

    out_pad = pl.pallas_call(
        kernel,
        out_shape=jax.ShapeDtypeStruct((n_pad, n_pad), jnp.float32),
        grid_spec=pltpu.PrefetchScalarGridSpec(
            num_scalar_prefetch=0,
            grid=grid,
            in_specs=[
                pl.BlockSpec((tm, F), lambda i, j: (i, 0), **row_spec_kwargs),  # row tile
                pl.BlockSpec((tn, F), lambda i, j: (j, 0)),                     # col tile
                pl.BlockSpec((tm, 1), lambda i, j: (i, 0)),                     # row norms
                pl.BlockSpec((1, tn), lambda i, j: (0, j)),                     # col norms
            ],
            out_specs=pl.BlockSpec((tm, tn), lambda i, j: (i, j)),
        ),
        compiler_params=pltpu.CompilerParams(
            dimension_semantics=("parallel", "parallel"),
            vmem_limit_bytes=budget,
        ),
    )(Z, Z, sq_r, sq_c)
    # TODO(synk): for very large F, cast row/col tiles to bf16 for the Gram
    # matmul (keep d2 math in f32) and/or emit a bf16 output — only worth it
    # once the MXU / HBM writeback rivals the EUP time (verify with a bundle dump).

    if n_pad == n:
        return out_pad
    return out_pad[:n, :n]


def _reference(X, Y, alphas=ALPHAS, linear_weight=LINEAR_WEIGHT):
    """Pure-JAX mirror of the PyTorch forward (matmul-free: exact f32 VPU path)."""
    Z = jnp.concatenate([X, Y], axis=0).astype(jnp.float32)
    diff = Z[:, None, :] - Z[None, :, :]
    d2 = jnp.sum(diff * diff, axis=-1)
    lin = jnp.sum(Z[:, None, :] * Z[None, :, :], axis=-1)
    rq = sum((1.0 + d2 / (2.0 * a)) ** (-a) for a in alphas)
    return rq + linear_weight * lin


if __name__ == "__main__":
    # Small case (padded to one 128x128 tile): B=4 samples per side, F=32 features.
    kx, ky = jax.random.split(jax.random.PRNGKey(0))
    B, F = 4, 32
    X = jax.random.normal(kx, (B, F), dtype=jnp.float32)
    Y = jax.random.normal(ky, (B, F), dtype=jnp.float32)
    out = jax.block_until_ready(mixture_rq_linear(X, Y))
    assert out.shape == (2 * B, 2 * B)
    # Tolerance accounts for the approx EUP reciprocal used for the integer alphas.
    np.testing.assert_allclose(
        np.asarray(out), np.asarray(_reference(X, Y)), rtol=1e-2, atol=1e-2
    )

    # Non-128-multiple n exercises the zero-padding + slicing path and a 256-wide
    # tile: n = 2*100 = 200 -> padded to 256.
    kx2, ky2 = jax.random.split(jax.random.PRNGKey(1))
    B2, F2 = 100, 64
    X2 = jax.random.normal(kx2, (B2, F2), dtype=jnp.float32)
    Y2 = jax.random.normal(ky2, (B2, F2), dtype=jnp.float32)
    out2 = jax.block_until_ready(mixture_rq_linear(X2, Y2))
    assert out2.shape == (2 * B2, 2 * B2)
    np.testing.assert_allclose(
        np.asarray(out2), np.asarray(_reference(X2, Y2)), rtol=1e-2, atol=2e-2
    )

    print("KERNEL_OK")
</pallas_src>

<mosaic_0001>
module attributes {stable_mosaic.version = 11 : i64} {
  func.func @_mix_rq_linear_kernel(%arg0: i32, %arg1: i32, %arg2: memref<128x32xf32, #tpu.memory_space<vmem>>, %arg3: memref<128x32xf32, #tpu.memory_space<vmem>>, %arg4: memref<128x1xf32, #tpu.memory_space<vmem>>, %arg5: memref<1x128xf32, #tpu.memory_space<vmem>>, %arg6: memref<128x128xf32, #tpu.memory_space<vmem>>) attributes {dimension_semantics = [#tpu.dimension_semantics<parallel>, #tpu.dimension_semantics<parallel>], iteration_bounds = array<i64: 1, 1>, scalar_prefetch = 0 : i64, scratch_operands = 0 : i64, tpu.core_type = #tpu.core_type<tc>, window_params = [{transform_indices = @transform_0, window_bounds = array<i64: 128, 32>}, {transform_indices = @transform_1, window_bounds = array<i64: 128, 32>}, {transform_indices = @transform_2, window_bounds = array<i64: 128, 1>}, {transform_indices = @transform_3, window_bounds = array<i64: 1, 128>}, {transform_indices = @transform_4, window_bounds = array<i64: 128, 128>}]} {
    %c0 = arith.constant 0 : index
    %c0_0 = arith.constant 0 : index
    %0 = vector.load %arg2[%c0, %c0_0] : memref<128x32xf32, #tpu.memory_space<vmem>>, vector<128x32xf32>
    %c0_1 = arith.constant 0 : index
    %c0_2 = arith.constant 0 : index
    %1 = vector.load %arg3[%c0_1, %c0_2] : memref<128x32xf32, #tpu.memory_space<vmem>>, vector<128x32xf32>
    %cst = arith.constant dense<0.000000e+00> : vector<128x128xf32>
    %2 = tpu.matmul %0, %1, %cst {dimension_numbers = #tpu.dot_dimension_numbers<[1], [1], [0], [0], [0, 0, 1, 0], [], []>} : vector<128x32xf32>, vector<128x32xf32>, vector<128x128xf32> -> vector<128x128xf32>
    %c0_3 = arith.constant 0 : index
    %c0_4 = arith.constant 0 : index
    %3 = vector.load %arg4[%c0_3, %c0_4] : memref<128x1xf32, #tpu.memory_space<vmem>>, vector<128x1xf32>
    %c0_5 = arith.constant 0 : index
    %c0_6 = arith.constant 0 : index
    %4 = vector.load %arg5[%c0_5, %c0_6] : memref<1x128xf32, #tpu.memory_space<vmem>>, vector<1x128xf32>
    %5 = vector.broadcast %3 : vector<128x1xf32> to vector<128x128xf32>
    %6 = vector.broadcast %4 : vector<1x128xf32> to vector<128x128xf32>
    %7 = arith.addf %5, %6 : vector<128x128xf32>
    %cst_7 = arith.constant 2.000000e+00 : f32
    %8 = vector.broadcast %cst_7 : f32 to vector<128x128xf32>
    %9 = arith.mulf %8, %2 : vector<128x128xf32>
    %10 = arith.subf %7, %9 : vector<128x128xf32>
    %cst_8 = arith.constant 0.000000e+00 : f32
    %11 = vector.broadcast %cst_8 : f32 to vector<128x128xf32>
    %12 = arith.maximumf %10, %11 : vector<128x128xf32>
    %cst_9 = arith.constant 2.500000e+00 : f32
    %13 = vector.broadcast %cst_9 : f32 to vector<128x128xf32>
    %14 = arith.mulf %12, %13 : vector<128x128xf32>
    %cst_10 = arith.constant 1.000000e+00 : f32
    %15 = vector.broadcast %cst_10 : f32 to vector<128x128xf32>
    %16 = arith.addf %15, %14 : vector<128x128xf32>
    %17 = math.log %16 : vector<128x128xf32>
    %cst_11 = arith.constant -2.000000e-01 : f32
    %18 = vector.broadcast %cst_11 : f32 to vector<128x128xf32>
    %19 = arith.mulf %18, %17 : vector<128x128xf32>
    %20 = math.exp %19 : vector<128x128xf32>
    %21 = arith.addf %2, %20 : vector<128x128xf32>
    %cst_12 = arith.constant 1.000000e+00 : f32
    %22 = vector.broadcast %cst_12 : f32 to vector<128x128xf32>
    %23 = arith.mulf %12, %22 : vector<128x128xf32>
    %cst_13 = arith.constant 1.000000e+00 : f32
    %24 = vector.broadcast %cst_13 : f32 to vector<128x128xf32>
    %25 = arith.addf %24, %23 : vector<128x128xf32>
    %26 = math.rsqrt %25 : vector<128x128xf32>
    %27 = arith.addf %21, %26 : vector<128x128xf32>
    %cst_14 = arith.constant 5.000000e-01 : f32
    %28 = vector.broadcast %cst_14 : f32 to vector<128x128xf32>
    %29 = arith.mulf %12, %28 : vector<128x128xf32>
    %cst_15 = arith.constant 1.000000e+00 : f32
    %30 = vector.broadcast %cst_15 : f32 to vector<128x128xf32>
    %31 = arith.addf %30, %29 : vector<128x128xf32>
    %32 = tpu.reciprocal %31 {approx = true} : vector<128x128xf32> -> vector<128x128xf32>
    %33 = arith.addf %27, %32 : vector<128x128xf32>
    %cst_16 = arith.constant 2.500000e-01 : f32
    %34 = vector.broadcast %cst_16 : f32 to vector<128x128xf32>
    %35 = arith.mulf %12, %34 : vector<128x128xf32>
    %cst_17 = arith.constant 1.000000e+00 : f32
    %36 = vector.broadcast %cst_17 : f32 to vector<128x128xf32>
    %37 = arith.addf %36, %35 : vector<128x128xf32>
    %38 = tpu.reciprocal %37 {approx = true} : vector<128x128xf32> -> vector<128x128xf32>
    %39 = arith.mulf %38, %38 : vector<128x128xf32>
    %40 = arith.addf %33, %39 : vector<128x128xf32>
    %cst_18 = arith.constant 1.000000e-01 : f32
    %41 = vector.broadcast %cst_18 : f32 to vector<128x128xf32>
    %42 = arith.mulf %12, %41 : vector<128x128xf32>
    %cst_19 = arith.constant 1.000000e+00 : f32
    %43 = vector.broadcast %cst_19 : f32 to vector<128x128xf32>
    %44 = arith.addf %43, %42 : vector<128x128xf32>
    %45 = tpu.reciprocal %44 {approx = true} : vector<128x128xf32> -> vector<128x128xf32>
    %46 = arith.mulf %45, %45 : vector<128x128xf32>
    %47 = arith.mulf %46, %46 : vector<128x128xf32>
    %48 = arith.mulf %45, %47 : vector<128x128xf32>
    %49 = arith.addf %40, %48 : vector<128x128xf32>
    %c0_20 = arith.constant 0 : index
    %c0_21 = arith.constant 0 : index
    %50 = vector.load %arg6[%c0_20, %c0_21] : memref<128x128xf32, #tpu.memory_space<vmem>>, vector<128x128xf32>
    tpu.vector_store %arg6[%c0_20, %c0_21], %49 {strides = array<i32>} : memref<128x128xf32, #tpu.memory_space<vmem>>, vector<128x128xf32>,
    return
  }
  func.func @transform_0(%arg0: i32, %arg1: i32) -> (i32, i32) {
    %c0_i32 = arith.constant 0 : i32
    %c0_i32_0 = arith.constant 0 : i32
    return %arg0, %c0_i32 : i32, i32
  }
  func.func @transform_1(%arg0: i32, %arg1: i32) -> (i32, i32) {
    %c0_i32 = arith.constant 0 : i32
    %c0_i32_0 = arith.constant 0 : i32
    return %arg1, %c0_i32 : i32, i32
  }
  func.func @transform_2(%arg0: i32, %arg1: i32) -> (i32, i32) {
    %c0_i32 = arith.constant 0 : i32
    %c0_i32_0 = arith.constant 0 : i32
    return %arg0, %c0_i32 : i32, i32
  }
  func.func @transform_3(%arg0: i32, %arg1: i32) -> (i32, i32) {
    %c0_i32 = arith.constant 0 : i32
    %c0_i32_0 = arith.constant 0 : i32
    return %c0_i32, %arg1 : i32, i32
  }
  func.func @transform_4(%arg0: i32, %arg1: i32) -> (i32, i32) {
    %c0_i32 = arith.constant 0 : i32
    return %arg0, %arg1 : i32, i32
  }
}

</mosaic_0001>

<llo_original>
// kernel: tpu_custom_call.1
$region0: #{tpu_custom_call.1}
  #allocation0 [shape = 'u32[]', space=smem, size = 0x4, offset = 0x4, fixed_abs, tag = 'smem constant byte address 0x4 - core index']
  #allocation1 [shape = 'u32[144,128]{1,0:T(1,128)}', space=vmem, size = 0x12000, scoped, tag = 'internal scratch']
  %s0 = inlined_call_operand.vmem [shape: f32[128,32], index: 0, kind: input, shape index: {}]
  %s1 = inlined_call_operand.vmem [shape: f32[128,32], index: 1, kind: input, shape index: {}]
  %s2 = inlined_call_operand.vmem [shape: f32[128,1], index: 2, kind: input, shape index: {}]
  %s3 = inlined_call_operand.vmem [shape: f32[1,128], index: 3, kind: input, shape index: {}]
  %s4 = inlined_call_operand.hbm [shape: f32[128,128], index: 4, kind: output, shape index: {}]
  %s5 = sld [smem:[#allocation0]]
  $region26: #{tpu_custom_call.1} parent=0
    _
  %s7 = ssub.s32 1, %s5
  %s8 = scalar_select 0, %s7, %s5
  $region1: #{tpu_custom_call.1} parent=0
    #allocation2 [shape = 'u8[65536]{0}', space=vmem, size = 0x10000, scoped, tag = 'output window, operand 0, single buffered']
    #allocation3 [shape = 's32[1]{0}', space=sflag, size = 0x4, scoped, tag = 'scoped memory for tpu_custom_call.1']
    %9 = vsyncpa [#allocation3], 0
    // Predicated region
    $region2: #{tpu_custom_call.1} parent=1 // pred_check
      _
    $region3: #{tpu_custom_call.1} parent=1 // pred_check_branch
      %11 = sbr.rel (0) target = $region5
    $region4: #{tpu_custom_call.1} parent=1 // pred_region
      _
    $region5: #{tpu_custom_call.1} parent=1 // pred_fallthru
      _
    // Predicated region
    $region6: #{tpu_custom_call.1} parent=1 // pred_check
      _
    $region7: #{tpu_custom_call.1} parent=1 // pred_check_branch
      %13 = sbr.rel (0) target = $region9
    $region8: #{tpu_custom_call.1} parent=1 // pred_region
      _
    $region9: #{tpu_custom_call.1} parent=1 // pred_fallthru
      _
    // Predicated region
    $region10: #{tpu_custom_call.1} parent=1 // pred_check
      _
    $region11: #{tpu_custom_call.1} parent=1 // pred_check_branch
      %15 = sbr.rel (0) target = $region13
    $region12: #{tpu_custom_call.1} parent=1 // pred_region
      _
    $region13: #{tpu_custom_call.1} parent=1 // pred_fallthru
      _
    // Predicated region
    $region14: #{tpu_custom_call.1} parent=1 // pred_check
      _
    $region15: #{tpu_custom_call.1} parent=1 // pred_check_branch
      %17 = sbr.rel (0) target = $region17
    $region16: #{tpu_custom_call.1} parent=1 // pred_region
      _
    $region17: #{tpu_custom_call.1} parent=1 // pred_fallthru
      _
    %v18 = vld [vmem:[%s0] sm:$0xff]
    %v19 = vld [vmem:[%s0 + $0x8] sm:$0xff]
    %v20 = vld [vmem:[%s0 + $0x10] sm:$0xff]
    %v21 = vld [vmem:[%s0 + $0x18] sm:$0xff]
    %v22 = vld [vmem:[%s0 + $0x20] sm:$0xff]
    %v23 = vld [vmem:[%s0 + $0x28] sm:$0xff]
    %v24 = vld [vmem:[%s0 + $0x30] sm:$0xff]
    %v25 = vld [vmem:[%s0 + $0x38] sm:$0xff]
    %v26 = vld [vmem:[%s0 + $0x40] sm:$0xff]
    %v27 = vld [vmem:[%s0 + $0x48] sm:$0xff]
    %v28 = vld [vmem:[%s0 + $0x50] sm:$0xff]
    %v29 = vld [vmem:[%s0 + $0x58] sm:$0xff]
    %v30 = vld [vmem:[%s0 + $0x60] sm:$0xff]
    %v31 = vld [vmem:[%s0 + $0x68] sm:$0xff]
    %v32 = vld [vmem:[%s0 + $0x70] sm:$0xff]
    %v33 = vld [vmem:[%s0 + $0x78] sm:$0xff]
    %v34 = vld [vmem:[%s1] sm:$0xff]
    %v35 = vld [vmem:[%s1 + $0x8] sm:$0xff]
    %v36 = vld [vmem:[%s1 + $0x10] sm:$0xff]
    %v37 = vld [vmem:[%s1 + $0x18] sm:$0xff]
    %v38 = vld [vmem:[%s1 + $0x20] sm:$0xff]
    %v39 = vld [vmem:[%s1 + $0x28] sm:$0xff]
    %v40 = vld [vmem:[%s1 + $0x30] sm:$0xff]
    %v41 = vld [vmem:[%s1 + $0x38] sm:$0xff]
    %v42 = vld [vmem:[%s1 + $0x40] sm:$0xff]
    %v43 = vld [vmem:[%s1 + $0x48] sm:$0xff]
    %v44 = vld [vmem:[%s1 + $0x50] sm:$0xff]
    %v45 = vld [vmem:[%s1 + $0x58] sm:$0xff]
    %v46 = vld [vmem:[%s1 + $0x60] sm:$0xff]
    %v47 = vld [vmem:[%s1 + $0x68] sm:$0xff]
    %v48 = vld [vmem:[%s1 + $0x70] sm:$0xff]
    %v49 = vld [vmem:[%s1 + $0x78] sm:$0xff]
    %vm50 = vcmask 261120
    %v52 = vsel %vm50, %v18, 0
    %v55 = vsel %vm50, %v19, 0
    %v58 = vsel %vm50, %v20, 0
    %v61 = vsel %vm50, %v21, 0
    %v64 = vsel %vm50, %v22, 0
    %v67 = vsel %vm50, %v23, 0
    %v70 = vsel %vm50, %v24, 0
    %v73 = vsel %vm50, %v25, 0
    %v76 = vsel %vm50, %v26, 0
    %v79 = vsel %vm50, %v27, 0
    %v82 = vsel %vm50, %v28, 0
    %v85 = vsel %vm50, %v29, 0
    %v88 = vsel %vm50, %v30, 0
    %v91 = vsel %vm50, %v31, 0
    %v94 = vsel %vm50, %v32, 0
    %v97 = vsel %vm50, %v33, 0
    %v100 = vsel %vm50, %v34, 0
    %v103 = vsel %vm50, %v35, 0
    %v106 = vsel %vm50, %v36, 0
    %v109 = vsel %vm50, %v37, 0
    %v112 = vsel %vm50, %v38, 0
    %v115 = vsel %vm50, %v39, 0
    %v118 = vsel %vm50, %v40, 0
    %v121 = vsel %vm50, %v41, 0
    %v124 = vsel %vm50, %v42, 0
    %v127 = vsel %vm50, %v43, 0
    %v130 = vsel %vm50, %v44, 0
    %v133 = vsel %vm50, %v45, 0
    %v136 = vsel %vm50, %v46, 0
    %v139 = vsel %vm50, %v47, 0
    %v142 = vsel %vm50, %v48, 0
    %v145 = vsel %vm50, %v49, 0
    %147 = vmatprep.subr.mxu0 0.0
    %148 = vmatpush1.xpose.msra.mxu0 %v100
    %149 = vmatprep.subr.mxu0 0.0
    %150 = vmatpush1.xpose.msra.mxu0 %v103
    %151 = vmatprep.subr.mxu0 0.0
    %152 = vmatpush1.xpose.msra.mxu0 %v106
    %153 = vmatprep.subr.mxu0 0.0
    %154 = vmatpush1.xpose.msra.mxu0 %v109
    %155 = vmatprep.subr.mxu0 0.0
    %156 = vmatpush1.xpose.msra.mxu0 %v112
    %157 = vmatprep.subr.mxu0 0.0
    %158 = vmatpush1.xpose.msra.mxu0 %v115
    %159 = vmatprep.subr.mxu0 0.0
    %160 = vmatpush1.xpose.msra.mxu0 %v118
    %161 = vmatprep.subr.mxu0 0.0
    %162 = vmatpush1.xpose.msra.mxu0 %v121
    %163 = vmatprep.subr.mxu0 0.0
    %164 = vmatpush1.xpose.msra.mxu0 %v124
    %165 = vmatprep.subr.mxu0 0.0
    %166 = vmatpush1.xpose.msra.mxu0 %v127
    %167 = vmatprep.subr.mxu0 0.0
    %168 = vmatpush1.xpose.msra.mxu0 %v130
    %169 = vmatprep.subr.mxu0 0.0
    %170 = vmatpush1.xpose.msra.mxu0 %v133
    %171 = vmatprep.subr.mxu0 0.0
    %172 = vmatpush1.xpose.msra.mxu0 %v136
    %173 = vmatprep.subr.mxu0 0.0
    %174 = vmatpush1.xpose.msra.mxu0 %v139
    %175 = vmatprep.subr.mxu0 0.0
    %176 = vmatpush1.xpose.msra.mxu0 %v142
    %177 = vmatprep.subr.mxu0 0.0
    %178 = vmatpush1.xpose.msra.mxu0 %v145
    %179 = vmatprep.subr.mxu0 0.0
    %180 = vmatpush1.xpose.msra.mxu0 0.0
    %181 = vmatprep.subr.mxu0 0.0
    %182 = vmatpush1.xpose.msra.mxu0 0.0
    %183 = vmatprep.subr.mxu0 0.0
    %184 = vmatpush1.xpose.msra.mxu0 0.0
    %185 = vmatprep.subr.mxu0 0.0
    %186 = vmatpush1.xpose.msra.mxu0 0.0
    %187 = vmatprep.subr.mxu0 0.0
    %188 = vmatpush1.xpose.msra.mxu0 0.0
    %189 = vmatprep.subr.mxu0 0.0
    %190 = vmatpush1.xpose.msra.mxu0 0.0
    %191 = vmatprep.subr.mxu0 0.0
    %192 = vmatpush1.xpose.msra.mxu0 0.0
    %193 = vmatprep.subr.mxu0 0.0
    %194 = vmatpush1.xpose.msra.mxu0 0.0
    %195 = vmatprep.subr.mxu0 0.0
    %196 = vmatpush1.xpose.msra.mxu0 0.0
    %197 = vmatprep.subr.mxu0 0.0
    %198 = vmatpush1.xpose.msra.mxu0 0.0
    %199 = vmatprep.subr.mxu0 0.0
    %200 = vmatpush1.xpose.msra.mxu0 0.0
    %201 = vmatprep.subr.mxu0 0.0
    %202 = vmatpush1.xpose.msra.mxu0 0.0
    %203 = vmatprep.subr.mxu0 0.0
    %204 = vmatpush1.xpose.msra.mxu0 0.0
    %205 = vmatprep.subr.mxu0 0.0
    %206 = vmatpush1.xpose.msra.mxu0 0.0
    %207 = vmatprep.subr.mxu0 0.0
    %208 = vmatpush1.xpose.msra.mxu0 0.0
    %209 = vmatprep.subr.mxu0 0.0
    %210 = vmatpush1.xpose.msra.mxu0 0.0
    %211 = vmatprep.mubr.f32.mxu0 0.0
    %212 = vmatmul.mubr.f32.gmra.mrb[0].mxu0 %v52
    %v213 = vpop.f32.mrb[0].mxu0
    %v214 = vadd.f32 0.0, %v213
    %v215 = vpop.f32.mrb[0].mxu0
    %216 = vmatprep.mubr.f32.mxu0 0.0
    %217 = vmatmul.mubr.f32.gmra.mrb[0].mxu0 %v55
    %v218 = vpop.f32.mrb[0].mxu0
    %v219 = vadd.f32 0.0, %v218
    %v220 = vpop.f32.mrb[0].mxu0
    %221 = vmatprep.mubr.f32.mxu0 0.0
    %222 = vmatmul.mubr.f32.gmra.mrb[0].mxu0 %v58
    %v223 = vpop.f32.mrb[0].mxu0
    %v224 = vadd.f32 0.0, %v223
    %v225 = vpop.f32.mrb[0].mxu0
    %226 = vmatprep.mubr.f32.mxu0 0.0
    %227 = vmatmul.mubr.f32.gmra.mrb[0].mxu0 %v61
    %v228 = vpop.f32.mrb[0].mxu0
    %v229 = vadd.f32 0.0, %v228
    %v230 = vpop.f32.mrb[0].mxu0
    %231 = vmatprep.mubr.f32.mxu0 0.0
    %232 = vmatmul.mubr.f32.gmra.mrb[0].mxu0 %v64
    %v233 = vpop.f32.mrb[0].mxu0
    %v234 = vadd.f32 0.0, %v233
    %v235 = vpop.f32.mrb[0].mxu0
    %236 = vmatprep.mubr.f32.mxu0 0.0
    %237 = vmatmul.mubr.f32.gmra.mrb[0].mxu0 %v67
    %v238 = vpop.f32.mrb[0].mxu0
    %v239 = vadd.f32 0.0, %v238
    %v240 = vpop.f32.mrb[0].mxu0
    %241 = vmatprep.mubr.f32.mxu0 0.0
    %242 = vmatmul.mubr.f32.gmra.mrb[0].mxu0 %v70
    %v243 = vpop.f32.mrb[0].mxu0
    %v244 = vadd.f32 0.0, %v243
    %v245 = vpop.f32.mrb[0].mxu0
    %246 = vmatprep.mubr.f32.mxu0 0.0
    %247 = vmatmul.mubr.f32.gmra.mrb[0].mxu0 %v73
    %v248 = vpop.f32.mrb[0].mxu0
    %v249 = vadd.f32 0.0, %v248
    %v250 = vpop.f32.mrb[0].mxu0
    %251 = vmatprep.mubr.f32.mxu0 0.0
    %252 = vmatmul.mubr.f32.gmra.mrb[0].mxu0 %v76
    %v253 = vpop.f32.mrb[0].mxu0
    %v254 = vadd.f32 0.0, %v253
    %v255 = vpop.f32.mrb[0].mxu0
    %256 = vmatprep.mubr.f32.mxu0 0.0
    %257 = vmatmul.mubr.f32.gmra.mrb[0].mxu0 %v79
    %v258 = vpop.f32.mrb[0].mxu0
    %v259 = vadd.f32 0.0, %v258
    %v260 = vpop.f32.mrb[0].mxu0
    %261 = vmatprep.mubr.f32.mxu0 0.0
    %262 = vmatmul.mubr.f32.gmra.mrb[0].mxu0 %v82
    %v263 = vpop.f32.mrb[0].mxu0
    %v264 = vadd.f32 0.0, %v263
    %v265 = vpop.f32.mrb[0].mxu0
    %266 = vmatprep.mubr.f32.mxu0 0.0
    %267 = vmatmul.mubr.f32.gmra.mrb[0].mxu0 %v85
    %v268 = vpop.f32.mrb[0].mxu0
    %v269 = vadd.f32 0.0, %v268
    %v270 = vpop.f32.mrb[0].mxu0
    %271 = vmatprep.mubr.f32.mxu0 0.0
    %272 = vmatmul.mubr.f32.gmra.mrb[0].mxu0 %v88
    %v273 = vpop.f32.mrb[0].mxu0
    %v274 = vadd.f32 0.0, %v273
    %v275 = vpop.f32.mrb[0].mxu0
    %276 = vmatprep.mubr.f32.mxu0 0.0
    %277 = vmatmul.mubr.f32.gmra.mrb[0].mxu0 %v91
    %v278 = vpop.f32.mrb[0].mxu0
    %v279 = vadd.f32 0.0, %v278
    %v280 = vpop.f32.mrb[0].mxu0
    %281 = vmatprep.mubr.f32.mxu0 0.0
    %282 = vmatmul.mubr.f32.gmra.mrb[0].mxu0 %v94
    %v283 = vpop.f32.mrb[0].mxu0
    %v284 = vadd.f32 0.0, %v283
    %v285 = vpop.f32.mrb[0].mxu0
    %286 = vmatprep.mubr.f32.mxu0 0.0
    %287 = vmatmul.mubr.f32.gmra.mrb[0].mxu0 %v97
    %v288 = vpop.f32.mrb[0].mxu0
    %v289 = vadd.f32 0.0, %v288
    %v290 = vpop.f32.mrb[0].mxu0
    %291 = vdwg.mxu0
    %v292 = vld [vmem:[%s2] sm:$0xff]
    %v293 = vld [vmem:[%s2 + $0x8] sm:$0xff]
    %v294 = vld [vmem:[%s2 + $0x10] sm:$0xff]
    %v295 = vld [vmem:[%s2 + $0x18] sm:$0xff]
    %v296 = vld [vmem:[%s2 + $0x20] sm:$0xff]
    %v297 = vld [vmem:[%s2 + $0x28] sm:$0xff]
    %v298 = vld [vmem:[%s2 + $0x30] sm:$0xff]
    %v299 = vld [vmem:[%s2 + $0x38] sm:$0xff]
    %v300 = vld [vmem:[%s2 + $0x40] sm:$0xff]
    %v301 = vld [vmem:[%s2 + $0x48] sm:$0xff]
    %v302 = vld [vmem:[%s2 + $0x50] sm:$0xff]
    %v303 = vld [vmem:[%s2 + $0x58] sm:$0xff]
    %v304 = vld [vmem:[%s2 + $0x60] sm:$0xff]
    %v305 = vld [vmem:[%s2 + $0x68] sm:$0xff]
    %v306 = vld [vmem:[%s2 + $0x70] sm:$0xff]
    %v307 = vld [vmem:[%s2 + $0x78] sm:$0xff]
    %v308 = vld [vmem:[%s3] sm:$0x1]
    %310 = vset.pattern.permute.xlu0 0
    %311 = vperm.xlu0 %310, %v292
    %v312 = vpop.permute.xlu0 %311
    %315 = vset.pattern.permute.xlu0 0
    %316 = vperm.xlu0 %315, %v293
    %v317 = vpop.permute.xlu0 %316
    %320 = vset.pattern.permute.xlu0 0
    %321 = vperm.xlu0 %320, %v294
    %v322 = vpop.permute.xlu0 %321
    %325 = vset.pattern.permute.xlu0 0
    %326 = vperm.xlu0 %325, %v295
    %v327 = vpop.permute.xlu0 %326
    %330 = vset.pattern.permute.xlu0 0
    %331 = vperm.xlu0 %330, %v296
    %v332 = vpop.permute.xlu0 %331
    %335 = vset.pattern.permute.xlu0 0
    %336 = vperm.xlu0 %335, %v297
    %v337 = vpop.permute.xlu0 %336
    %340 = vset.pattern.permute.xlu0 0
    %341 = vperm.xlu0 %340, %v298
    %v342 = vpop.permute.xlu0 %341
    %345 = vset.pattern.permute.xlu0 0
    %346 = vperm.xlu0 %345, %v299
    %v347 = vpop.permute.xlu0 %346
    %350 = vset.pattern.permute.xlu0 0
    %351 = vperm.xlu0 %350, %v300
    %v352 = vpop.permute.xlu0 %351
    %355 = vset.pattern.permute.xlu0 0
    %356 = vperm.xlu0 %355, %v301
    %v357 = vpop.permute.xlu0 %356
    %360 = vset.pattern.permute.xlu0 0
    %361 = vperm.xlu0 %360, %v302
    %v362 = vpop.permute.xlu0 %361
    %365 = vset.pattern.permute.xlu0 0
    %366 = vperm.xlu0 %365, %v303
    %v367 = vpop.permute.xlu0 %366
    %370 = vset.pattern.permute.xlu0 0
    %371 = vperm.xlu0 %370, %v304
    %v372 = vpop.permute.xlu0 %371
    %375 = vset.pattern.permute.xlu0 0
    %376 = vperm.xlu0 %375, %v305
    %v377 = vpop.permute.xlu0 %376
    %380 = vset.pattern.permute.xlu0 0
    %381 = vperm.xlu0 %380, %v306
    %v382 = vpop.permute.xlu0 %381
    %385 = vset.pattern.permute.xlu0 0
    %386 = vperm.xlu0 %385, %v307
    %v387 = vpop.permute.xlu0 %386
    %v390 = vlaneseq
    %v391 = vshrl.u32 %v390, 7
    %v392 = vsub.s32 0, %v391
    %v393 = vrot.slane %v308, %v392
    %v395 = vadd.f32 %v312, %v393
    %v396 = vadd.f32 %v317, %v393
    %v397 = vadd.f32 %v322, %v393
    %v398 = vadd.f32 %v327, %v393
    %v399 = vadd.f32 %v332, %v393
    %v400 = vadd.f32 %v337, %v393
    %v401 = vadd.f32 %v342, %v393
    %v402 = vadd.f32 %v347, %v393
    %v403 = vadd.f32 %v352, %v393
    %v404 = vadd.f32 %v357, %v393
    %v405 = vadd.f32 %v362, %v393
    %v406 = vadd.f32 %v367, %v393
    %v407 = vadd.f32 %v372, %v393
    %v408 = vadd.f32 %v377, %v393
    %v409 = vadd.f32 %v382, %v393
    %v410 = vadd.f32 %v387, %v393
    %v411 = vmul.f32 %v214, 2.0
    %v412 = vmul.f32 %v219, 2.0
    %v413 = vmul.f32 %v224, 2.0
    %v414 = vmul.f32 %v229, 2.0
    %v415 = vmul.f32 %v234, 2.0
    %v416 = vmul.f32 %v239, 2.0
    %v417 = vmul.f32 %v244, 2.0
    %v418 = vmul.f32 %v249, 2.0
    %v419 = vmul.f32 %v254, 2.0
    %v420 = vmul.f32 %v259, 2.0
    %v421 = vmul.f32 %v264, 2.0
    %v422 = vmul.f32 %v269, 2.0
    %v423 = vmul.f32 %v274, 2.0
    %v424 = vmul.f32 %v279, 2.0
    %v425 = vmul.f32 %v284, 2.0
    %v426 = vmul.f32 %v289, 2.0
    %v427 = vsub.f32 %v395, %v411
    %v428 = vsub.f32 %v396, %v412
    %v429 = vsub.f32 %v397, %v413
    %v430 = vsub.f32 %v398, %v414
    %v431 = vsub.f32 %v399, %v415
    %v432 = vsub.f32 %v400, %v416
    %v433 = vsub.f32 %v401, %v417
    %v434 = vsub.f32 %v402, %v418
    %v435 = vsub.f32 %v403, %v419
    %v436 = vsub.f32 %v404, %v420
    %v437 = vsub.f32 %v405, %v421
    %v438 = vsub.f32 %v406, %v422
    %v439 = vsub.f32 %v407, %v423
    %v440 = vsub.f32 %v408, %v424
    %v441 = vsub.f32 %v409, %v425
    %v442 = vsub.f32 %v410, %v426
    %v443 = vmax.f32 %v427, 0.0
    %v444 = vmax.f32 %v428, 0.0
    %v445 = vmax.f32 %v429, 0.0
    %v446 = vmax.f32 %v430, 0.0
    %v447 = vmax.f32 %v431, 0.0
    %v448 = vmax.f32 %v432, 0.0
    %v449 = vmax.f32 %v433, 0.0
    %v450 = vmax.f32 %v434, 0.0
    %v451 = vmax.f32 %v435, 0.0
    %v452 = vmax.f32 %v436, 0.0
    %v453 = vmax.f32 %v437, 0.0
    %v454 = vmax.f32 %v438, 0.0
    %v455 = vmax.f32 %v439, 0.0
    %v456 = vmax.f32 %v440, 0.0
    %v457 = vmax.f32 %v441, 0.0
    %v458 = vmax.f32 %v442, 0.0
    %v459 = vmul.f32 %v443, 2.5
    %v460 = vmul.f32 %v444, 2.5
    %v461 = vmul.f32 %v445, 2.5
    %v462 = vmul.f32 %v446, 2.5
    %v463 = vmul.f32 %v447, 2.5
    %v464 = vmul.f32 %v448, 2.5
    %v465 = vmul.f32 %v449, 2.5
    %v466 = vmul.f32 %v450, 2.5
    %v467 = vmul.f32 %v451, 2.5
    %v468 = vmul.f32 %v452, 2.5
    %v469 = vmul.f32 %v453, 2.5
    %v470 = vmul.f32 %v454, 2.5
    %v471 = vmul.f32 %v455, 2.5
    %v472 = vmul.f32 %v456, 2.5
    %v473 = vmul.f32 %v457, 2.5
    %v474 = vmul.f32 %v458, 2.5
    %v475 = vadd.f32 %v459, 1.0
    %v476 = vadd.f32 %v460, 1.0
    %v477 = vadd.f32 %v461, 1.0
    %v478 = vadd.f32 %v462, 1.0
    %v479 = vadd.f32 %v463, 1.0
    %v480 = vadd.f32 %v464, 1.0
    %v481 = vadd.f32 %v465, 1.0
    %v482 = vadd.f32 %v466, 1.0
    %v483 = vadd.f32 %v467, 1.0
    %v484 = vadd.f32 %v468, 1.0
    %v485 = vadd.f32 %v469, 1.0
    %v486 = vadd.f32 %v470, 1.0
    %v487 = vadd.f32 %v471, 1.0
    %v488 = vadd.f32 %v472, 1.0
    %v489 = vadd.f32 %v473, 1.0
    %v490 = vadd.f32 %v474, 1.0
    %v491 = vlog2.pop %v475
    %v492 = vmul.f32 %v491, 0.6931472
    %v493 = vlog2.pop %v476
    %v494 = vmul.f32 %v493, 0.6931472
    %v495 = vlog2.pop %v477
    %v496 = vmul.f32 %v495, 0.6931472
    %v497 = vlog2.pop %v478
    %v498 = vmul.f32 %v497, 0.6931472
    %v499 = vlog2.pop %v479
    %v500 = vmul.f32 %v499, 0.6931472
    %v501 = vlog2.pop %v480
    %v502 = vmul.f32 %v501, 0.6931472
    %v503 = vlog2.pop %v481
    %v504 = vmul.f32 %v503, 0.6931472
    %v505 = vlog2.pop %v482
    %v506 = vmul.f32 %v505, 0.6931472
    %v507 = vlog2.pop %v483
    %v508 = vmul.f32 %v507, 0.6931472
    %v509 = vlog2.pop %v484
    %v510 = vmul.f32 %v509, 0.6931472
    %v511 = vlog2.pop %v485
    %v512 = vmul.f32 %v511, 0.6931472
    %v513 = vlog2.pop %v486
    %v514 = vmul.f32 %v513, 0.6931472
    %v515 = vlog2.pop %v487
    %v516 = vmul.f32 %v515, 0.6931472
    %v517 = vlog2.pop %v488
    %v518 = vmul.f32 %v517, 0.6931472
    %v519 = vlog2.pop %v489
    %v520 = vmul.f32 %v519, 0.6931472
    %v521 = vlog2.pop %v490
    %v522 = vmul.f32 %v521, 0.6931472
    %v523 = vmul.f32 %v492, -0.2
    %v524 = vmul.f32 %v494, -0.2
    %v525 = vmul.f32 %v496, -0.2
    %v526 = vmul.f32 %v498, -0.2
    %v527 = vmul.f32 %v500, -0.2
    %v528 = vmul.f32 %v502, -0.2
    %v529 = vmul.f32 %v504, -0.2
    %v530 = vmul.f32 %v506, -0.2
    %v531 = vmul.f32 %v508, -0.2
    %v532 = vmul.f32 %v510, -0.2
    %v533 = vmul.f32 %v512, -0.2
    %v534 = vmul.f32 %v514, -0.2
    %v535 = vmul.f32 %v516, -0.2
    %v536 = vmul.f32 %v518, -0.2
    %v537 = vmul.f32 %v520, -0.2
    %v538 = vmul.f32 %v522, -0.2
    %v539 = vmul.f32 %v523, 1.442695
    %v540 = vpow.pop %v539
    %v541 = vmul.f32 %v524, 1.442695
    %v542 = vpow.pop %v541
    %v543 = vmul.f32 %v525, 1.442695
    %v544 = vpow.pop %v543
    %v545 = vmul.f32 %v526, 1.442695
    %v546 = vpow.pop %v545
    %v547 = vmul.f32 %v527, 1.442695
    %v548 = vpow.pop %v547
    %v549 = vmul.f32 %v528, 1.442695
    %v550 = vpow.pop %v549
    %v551 = vmul.f32 %v529, 1.442695
    %v552 = vpow.pop %v551
    %v553 = vmul.f32 %v530, 1.442695
    %v554 = vpow.pop %v553
    %v555 = vmul.f32 %v531, 1.442695
    %v556 = vpow.pop %v555
    %v557 = vmul.f32 %v532, 1.442695
    %v558 = vpow.pop %v557
    %v559 = vmul.f32 %v533, 1.442695
    %v560 = vpow.pop %v559
    %v561 = vmul.f32 %v534, 1.442695
    %v562 = vpow.pop %v561
    %v563 = vmul.f32 %v535, 1.442695
    %v564 = vpow.pop %v563
    %v565 = vmul.f32 %v536, 1.442695
    %v566 = vpow.pop %v565
    %v567 = vmul.f32 %v537, 1.442695
    %v568 = vpow.pop %v567
    %v569 = vmul.f32 %v538, 1.442695
    %v570 = vpow.pop %v569
    %v571 = vadd.f32 %v214, %v540
    %v572 = vadd.f32 %v219, %v542
    %v573 = vadd.f32 %v224, %v544
    %v574 = vadd.f32 %v229, %v546
    %v575 = vadd.f32 %v234, %v548
    %v576 = vadd.f32 %v239, %v550
    %v577 = vadd.f32 %v244, %v552
    %v578 = vadd.f32 %v249, %v554
    %v579 = vadd.f32 %v254, %v556
    %v580 = vadd.f32 %v259, %v558
    %v581 = vadd.f32 %v264, %v560
    %v582 = vadd.f32 %v269, %v562
    %v583 = vadd.f32 %v274, %v564
    %v584 = vadd.f32 %v279, %v566
    %v585 = vadd.f32 %v284, %v568
    %v586 = vadd.f32 %v289, %v570
    %v587 = vadd.f32 %v443, 1.0
    %v588 = vadd.f32 %v444, 1.0
    %v589 = vadd.f32 %v445, 1.0
    %v590 = vadd.f32 %v446, 1.0
    %v591 = vadd.f32 %v447, 1.0
    %v592 = vadd.f32 %v448, 1.0
    %v593 = vadd.f32 %v449, 1.0
    %v594 = vadd.f32 %v450, 1.0
    %v595 = vadd.f32 %v451, 1.0
    %v596 = vadd.f32 %v452, 1.0
    %v597 = vadd.f32 %v453, 1.0
    %v598 = vadd.f32 %v454, 1.0
    %v599 = vadd.f32 %v455, 1.0
    %v600 = vadd.f32 %v456, 1.0
    %v601 = vadd.f32 %v457, 1.0
    %v602 = vadd.f32 %v458, 1.0
    %v603 = vrsqrt.pop %v587
    %v604 = vrsqrt.pop %v588
    %v605 = vrsqrt.pop %v589
    %v606 = vrsqrt.pop %v590
    %v607 = vrsqrt.pop %v591
    %v608 = vrsqrt.pop %v592
    %v609 = vrsqrt.pop %v593
    %v610 = vrsqrt.pop %v594
    %v611 = vrsqrt.pop %v595
    %v612 = vrsqrt.pop %v596
    %v613 = vrsqrt.pop %v597
    %v614 = vrsqrt.pop %v598
    %v615 = vrsqrt.pop %v599
    %v616 = vrsqrt.pop %v600
    %v617 = vrsqrt.pop %v601
    %v618 = vrsqrt.pop %v602
    %v619 = vadd.f32 %v571, %v603
    %v620 = vadd.f32 %v572, %v604
    %v621 = vadd.f32 %v573, %v605
    %v622 = vadd.f32 %v574, %v606
    %v623 = vadd.f32 %v575, %v607
    %v624 = vadd.f32 %v576, %v608
    %v625 = vadd.f32 %v577, %v609
    %v626 = vadd.f32 %v578, %v610
    %v627 = vadd.f32 %v579, %v611
    %v628 = vadd.f32 %v580, %v612
    %v629 = vadd.f32 %v581, %v613
    %v630 = vadd.f32 %v582, %v614
    %v631 = vadd.f32 %v583, %v615
    %v632 = vadd.f32 %v584, %v616
    %v633 = vadd.f32 %v585, %v617
    %v634 = vadd.f32 %v586, %v618
    %v635 = vmul.f32 %v443, 0.5
    %v636 = vmul.f32 %v444, 0.5
    %v637 = vmul.f32 %v445, 0.5
    %v638 = vmul.f32 %v446, 0.5
    %v639 = vmul.f32 %v447, 0.5
    %v640 = vmul.f32 %v448, 0.5
    %v641 = vmul.f32 %v449, 0.5
    %v642 = vmul.f32 %v450, 0.5
    %v643 = vmul.f32 %v451, 0.5
    %v644 = vmul.f32 %v452, 0.5
    %v645 = vmul.f32 %v453, 0.5
    %v646 = vmul.f32 %v454, 0.5
    %v647 = vmul.f32 %v455, 0.5
    %v648 = vmul.f32 %v456, 0.5
    %v649 = vmul.f32 %v457, 0.5
    %v650 = vmul.f32 %v458, 0.5
    %v651 = vadd.f32 %v635, 1.0
    %v652 = vadd.f32 %v636, 1.0
    %v653 = vadd.f32 %v637, 1.0
    %v654 = vadd.f32 %v638, 1.0
    %v655 = vadd.f32 %v639, 1.0
    %v656 = vadd.f32 %v640, 1.0
    %v657 = vadd.f32 %v641, 1.0
    %v658 = vadd.f32 %v642, 1.0
    %v659 = vadd.f32 %v643, 1.0
    %v660 = vadd.f32 %v644, 1.0
    %v661 = vadd.f32 %v645, 1.0
    %v662 = vadd.f32 %v646, 1.0
    %v663 = vadd.f32 %v647, 1.0
    %v664 = vadd.f32 %v648, 1.0
    %v665 = vadd.f32 %v649, 1.0
    %v666 = vadd.f32 %v650, 1.0
    %v667 = vrcp.pop %v651
    %v668 = vrcp.pop %v652
    %v669 = vrcp.pop %v653
    %v670 = vrcp.pop %v654
    %v671 = vrcp.pop %v655
    %v672 = vrcp.pop %v656
    %v673 = vrcp.pop %v657
    %v674 = vrcp.pop %v658
    %v675 = vrcp.pop %v659
    %v676 = vrcp.pop %v660
    %v677 = vrcp.pop %v661
    %v678 = vrcp.pop %v662
    %v679 = vrcp.pop %v663
    %v680 = vrcp.pop %v664
    %v681 = vrcp.pop %v665
    %v682 = vrcp.pop %v666
    %v683 = vadd.f32 %v619, %v667
    %v684 = vadd.f32 %v620, %v668
    %v685 = vadd.f32 %v621, %v669
    %v686 = vadd.f32 %v622, %v670
    %v687 = vadd.f32 %v623, %v671
    %v688 = vadd.f32 %v624, %v672
    %v689 = vadd.f32 %v625, %v673
    %v690 = vadd.f32 %v626, %v674
    %v691 = vadd.f32 %v627, %v675
    %v692 = vadd.f32 %v628, %v676
    %v693 = vadd.f32 %v629, %v677
    %v694 = vadd.f32 %v630, %v678
    %v695 = vadd.f32 %v631, %v679
    %v696 = vadd.f32 %v632, %v680
    %v697 = vadd.f32 %v633, %v681
    %v698 = vadd.f32 %v634, %v682
    %v699 = vmul.f32 %v443, 0.25
    %v700 = vmul.f32 %v444, 0.25
    %v701 = vmul.f32 %v445, 0.25
    %v702 = vmul.f32 %v446, 0.25
    %v703 = vmul.f32 %v447, 0.25
    %v704 = vmul.f32 %v448, 0.25
    %v705 = vmul.f32 %v449, 0.25
    %v706 = vmul.f32 %v450, 0.25
    %v707 = vmul.f32 %v451, 0.25
    %v708 = vmul.f32 %v452, 0.25
    %v709 = vmul.f32 %v453, 0.25
    %v710 = vmul.f32 %v454, 0.25
    %v711 = vmul.f32 %v455, 0.25
    %v712 = vmul.f32 %v456, 0.25
    %v713 = vmul.f32 %v457, 0.25
    %v714 = vmul.f32 %v458, 0.25
    %v715 = vadd.f32 %v699, 1.0
    %v716 = vadd.f32 %v700, 1.0
    %v717 = vadd.f32 %v701, 1.0
    %v718 = vadd.f32 %v702, 1.0
    %v719 = vadd.f32 %v703, 1.0
    %v720 = vadd.f32 %v704, 1.0
    %v721 = vadd.f32 %v705, 1.0
    %v722 = vadd.f32 %v706, 1.0
    %v723 = vadd.f32 %v707, 1.0
    %v724 = vadd.f32 %v708, 1.0
    %v725 = vadd.f32 %v709, 1.0
    %v726 = vadd.f32 %v710, 1.0
    %v727 = vadd.f32 %v711, 1.0
    %v728 = vadd.f32 %v712, 1.0
    %v729 = vadd.f32 %v713, 1.0
    %v730 = vadd.f32 %v714, 1.0
    %v731 = vrcp.pop %v715
    %v732 = vrcp.pop %v716
    %v733 = vrcp.pop %v717
    %v734 = vrcp.pop %v718
    %v735 = vrcp.pop %v719
    %v736 = vrcp.pop %v720
    %v737 = vrcp.pop %v721
    %v738 = vrcp.pop %v722
    %v739 = vrcp.pop %v723
    %v740 = vrcp.pop %v724
    %v741 = vrcp.pop %v725
    %v742 = vrcp.pop %v726
    %v743 = vrcp.pop %v727
    %v744 = vrcp.pop %v728
    %v745 = vrcp.pop %v729
    %v746 = vrcp.pop %v730
    %v747 = vmul.f32 %v731, %v731
    %v748 = vmul.f32 %v732, %v732
    %v749 = vmul.f32 %v733, %v733
    %v750 = vmul.f32 %v734, %v734
    %v751 = vmul.f32 %v735, %v735
    %v752 = vmul.f32 %v736, %v736
    %v753 = vmul.f32 %v737, %v737
    %v754 = vmul.f32 %v738, %v738
    %v755 = vmul.f32 %v739, %v739
    %v756 = vmul.f32 %v740, %v740
    %v757 = vmul.f32 %v741, %v741
    %v758 = vmul.f32 %v742, %v742
    %v759 = vmul.f32 %v743, %v743
    %v760 = vmul.f32 %v744, %v744
    %v761 = vmul.f32 %v745, %v745
    %v762 = vmul.f32 %v746, %v746
    %v763 = vadd.f32 %v683, %v747
    %v764 = vadd.f32 %v684, %v748
    %v765 = vadd.f32 %v685, %v749
    %v766 = vadd.f32 %v686, %v750
    %v767 = vadd.f32 %v687, %v751
    %v768 = vadd.f32 %v688, %v752
    %v769 = vadd.f32 %v689, %v753
    %v770 = vadd.f32 %v690, %v754
    %v771 = vadd.f32 %v691, %v755
    %v772 = vadd.f32 %v692, %v756
    %v773 = vadd.f32 %v693, %v757
    %v774 = vadd.f32 %v694, %v758
    %v775 = vadd.f32 %v695, %v759
    %v776 = vadd.f32 %v696, %v760
    %v777 = vadd.f32 %v697, %v761
    %v778 = vadd.f32 %v698, %v762
    %v779 = vmul.f32 %v443, 0.1
    %v780 = vmul.f32 %v444, 0.1
    %v781 = vmul.f32 %v445, 0.1
    %v782 = vmul.f32 %v446, 0.1
    %v783 = vmul.f32 %v447, 0.1
    %v784 = vmul.f32 %v448, 0.1
    %v785 = vmul.f32 %v449, 0.1
    %v786 = vmul.f32 %v450, 0.1
    %v787 = vmul.f32 %v451, 0.1
    %v788 = vmul.f32 %v452, 0.1
    %v789 = vmul.f32 %v453, 0.1
    %v790 = vmul.f32 %v454, 0.1
    %v791 = vmul.f32 %v455, 0.1
    %v792 = vmul.f32 %v456, 0.1
    %v793 = vmul.f32 %v457, 0.1
    %v794 = vmul.f32 %v458, 0.1
    %v795 = vadd.f32 %v779, 1.0
    %v796 = vadd.f32 %v780, 1.0
    %v797 = vadd.f32 %v781, 1.0
    %v798 = vadd.f32 %v782, 1.0
    %v799 = vadd.f32 %v783, 1.0
    %v800 = vadd.f32 %v784, 1.0
    %v801 = vadd.f32 %v785, 1.0
    %v802 = vadd.f32 %v786, 1.0
    %v803 = vadd.f32 %v787, 1.0
    %v804 = vadd.f32 %v788, 1.0
    %v805 = vadd.f32 %v789, 1.0
    %v806 = vadd.f32 %v790, 1.0
    %v807 = vadd.f32 %v791, 1.0
    %v808 = vadd.f32 %v792, 1.0
    %v809 = vadd.f32 %v793, 1.0
    %v810 = vadd.f32 %v794, 1.0
    %v811 = vrcp.pop %v795
    %v812 = vrcp.pop %v796
    %v813 = vrcp.pop %v797
    %v814 = vrcp.pop %v798
    %v815 = vrcp.pop %v799
    %v816 = vrcp.pop %v800
    %v817 = vrcp.pop %v801
    %v818 = vrcp.pop %v802
    %v819 = vrcp.pop %v803
    %v820 = vrcp.pop %v804
    %v821 = vrcp.pop %v805
    %v822 = vrcp.pop %v806
    %v823 = vrcp.pop %v807
    %v824 = vrcp.pop %v808
    %v825 = vrcp.pop %v809
    %v826 = vrcp.pop %v810
    %v827 = vmul.f32 %v811, %v811
    %v828 = vmul.f32 %v812, %v812
    %v829 = vmul.f32 %v813, %v813
    %v830 = vmul.f32 %v814, %v814
    %v831 = vmul.f32 %v815, %v815
    %v832 = vmul.f32 %v816, %v816
    %v833 = vmul.f32 %v817, %v817
    %v834 = vmul.f32 %v818, %v818
    %v835 = vmul.f32 %v819, %v819
    %v836 = vmul.f32 %v820, %v820
    %v837 = vmul.f32 %v821, %v821
    %v838 = vmul.f32 %v822, %v822
    %v839 = vmul.f32 %v823, %v823
    %v840 = vmul.f32 %v824, %v824
    %v841 = vmul.f32 %v825, %v825
    %v842 = vmul.f32 %v826, %v826
    %v843 = vmul.f32 %v827, %v827
    %v844 = vmul.f32 %v828, %v828
    %v845 = vmul.f32 %v829, %v829
    %v846 = vmul.f32 %v830, %v830
    %v847 = vmul.f32 %v831, %v831
    %v848 = vmul.f32 %v832, %v832
    %v849 = vmul.f32 %v833, %v833
    %v850 = vmul.f32 %v834, %v834
    %v851 = vmul.f32 %v835, %v835
    %v852 = vmul.f32 %v836, %v836
    %v853 = vmul.f32 %v837, %v837
    %v854 = vmul.f32 %v838, %v838
    %v855 = vmul.f32 %v839, %v839
    %v856 = vmul.f32 %v840, %v840
    %v857 = vmul.f32 %v841, %v841
    %v858 = vmul.f32 %v842, %v842
    %v859 = vmul.f32 %v811, %v843
    %v860 = vmul.f32 %v812, %v844
    %v861 = vmul.f32 %v813, %v845
    %v862 = vmul.f32 %v814, %v846
    %v863 = vmul.f32 %v815, %v847
    %v864 = vmul.f32 %v816, %v848
    %v865 = vmul.f32 %v817, %v849
    %v866 = vmul.f32 %v818, %v850
    %v867 = vmul.f32 %v819, %v851
    %v868 = vmul.f32 %v820, %v852
    %v869 = vmul.f32 %v821, %v853
    %v870 = vmul.f32 %v822, %v854
    %v871 = vmul.f32 %v823, %v855
    %v872 = vmul.f32 %v824, %v856
    %v873 = vmul.f32 %v825, %v857
    %v874 = vmul.f32 %v826, %v858
    %v875 = vadd.f32 %v763, %v859
    %v876 = vadd.f32 %v764, %v860
    %v877 = vadd.f32 %v765, %v861
    %v878 = vadd.f32 %v766, %v862
    %v879 = vadd.f32 %v767, %v863
    %v880 = vadd.f32 %v768, %v864
    %v881 = vadd.f32 %v769, %v865
    %v882 = vadd.f32 %v770, %v866
    %v883 = vadd.f32 %v771, %v867
    %v884 = vadd.f32 %v772, %v868
    %v885 = vadd.f32 %v773, %v869
    %v886 = vadd.f32 %v774, %v870
    %v887 = vadd.f32 %v775, %v871
    %v888 = vadd.f32 %v776, %v872
    %v889 = vadd.f32 %v777, %v873
    %v890 = vadd.f32 %v778, %v874
    %891 = vst [vmem:[#allocation2] sm:$0xff] %v875
    %892 = vst [vmem:[#allocation2 + $0x8] sm:$0xff] %v876
    %893 = vst [vmem:[#allocation2 + $0x10] sm:$0xff] %v877
    %894 = vst [vmem:[#allocation2 + $0x18] sm:$0xff] %v878
    %895 = vst [vmem:[#allocation2 + $0x20] sm:$0xff] %v879
    %896 = vst [vmem:[#allocation2 + $0x28] sm:$0xff] %v880
    %897 = vst [vmem:[#allocation2 + $0x30] sm:$0xff] %v881
    %898 = vst [vmem:[#allocation2 + $0x38] sm:$0xff] %v882
    %899 = vst [vmem:[#allocation2 + $0x40] sm:$0xff] %v883
    %900 = vst [vmem:[#allocation2 + $0x48] sm:$0xff] %v884
    %901 = vst [vmem:[#allocation2 + $0x50] sm:$0xff] %v885
    %902 = vst [vmem:[#allocation2 + $0x58] sm:$0xff] %v886
    %903 = vst [vmem:[#allocation2 + $0x60] sm:$0xff] %v887
    %904 = vst [vmem:[#allocation2 + $0x68] sm:$0xff] %v888
    %905 = vst [vmem:[#allocation2 + $0x70] sm:$0xff] %v889
    %906 = vst [vmem:[#allocation2 + $0x78] sm:$0xff] %v890
    // Predicated region
    $region18: #{tpu_custom_call.1} parent=1 // pred_check
      _
    $region19: #{tpu_custom_call.1} parent=1 // pred_check_branch
      %908 = sbr.rel (0) target = $region21
    $region20: #{tpu_custom_call.1} parent=1 // pred_region
      %s910 = ssub.s32 2048, 2048
      %911 = vsyncadd [#allocation3], %s910
      %s912 = sshll.u32 [#allocation2], 4
      %s913 = int_to_ptr.vmem [resolvable:$true] %s912
      %918 = dma.vmem_to_hbm [thread:$0]  %s913, 2048, %s4, [#allocation3], 128, 128, 8
    $region21: #{tpu_custom_call.1} parent=1 // pred_fallthru
      _
    // Predicated region
    $region22: #{tpu_custom_call.1} parent=1 // pred_check
      _
    $region23: #{tpu_custom_call.1} parent=1 // pred_check_branch
      %920 = sbr.rel (0) target = $region25
    $region24: #{tpu_custom_call.1} parent=1 // pred_region
      %921 = dma.done [#allocation3], 2048
    $region25: #{tpu_custom_call.1} parent=1 // pred_fallthru
      _
    %922 = vsyncpa [#allocation3], 1

</llo_original>
